<compile_context>
chip_gen: v7x
topology: tpu7x:2x2x1
jax: 0.10.0
libtpu: 0.0.40
codegen_flags: <defaults>
</compile_context>

<pallas_src>
import functools

import jax
import jax.numpy as jnp
from jax import lax
from jax.experimental import pallas as pl
from jax.experimental.pallas import tpu as pltpu


def _vmem_capacity_bytes():
    """Per-generation VMEM capacity (falls back to a conservative 64 MiB)."""
    try:
        info = pltpu.get_tpu_info()
        for name in ("vmem_capacity_bytes", "vmem_bytes", "vmem_size_bytes"):
            v = getattr(info, name, None)
            if v:
                return int(v)
    except Exception:
        pass
    return 64 << 20


_VMEM_CAP = _vmem_capacity_bytes()
# Fused (single HBM read) threshold: ~16 MiB on v5e/v6e (128 MiB VMEM),
# ~8 MiB on v7x (64 MiB VMEM).
_FUSE_BYTES = max(2 << 20, min(_VMEM_CAP // 8, 24 << 20))
# Tiled-path blocks: 512 lanes (unmasked lane-dense vst); rows per generation:
# v7x (64 MiB VMEM, 3.2 TB/s HBM) -> 2048 rows = 4 MiB f32 blocks,
# v5e/v6e (128 MiB VMEM)          -> 1024 rows = 2 MiB f32 blocks.
_TILE_LANES = 512
_TILE_ROWS = 2048 if _VMEM_CAP <= (96 << 20) else 1024


def _affine_coeffs(sp, xbar):
    """out = A*x + B; same where-select semantics in both code paths."""
    r = sp / xbar
    beta = (1.0 - sp) / (1.0 - xbar)
    le = r <= 1.0
    a = jnp.where(le, r, beta)
    b = jnp.where(le, 0.0, 1.0 - beta)
    return a, b


# ---------------------------------------------------------------------------
# Fused path: whole prob map resident in VMEM as one lane-dense block.
#   params (SMEM, f32[2]) = [sparsity, true_element_count]
# ---------------------------------------------------------------------------
def _fused_kernel(params_ref, x_ref, o_ref):
    sp = params_ref[0]
    n = params_ref[1]
    x = x_ref[...].astype(jnp.float32)
    xbar = jnp.sum(x) / n          # zero padding does not perturb the sum
    a, b = _affine_coeffs(sp, xbar)
    o_ref[...] = (x * a + b).astype(o_ref.dtype)


# ---------------------------------------------------------------------------
# Tiled path, pass 1: global sum -> affine coefficients (A, B), all in-kernel.
#   params (SMEM, f32[2]) = [sparsity, true_element_count]
#   ab_ref (SMEM, f32[2]) = [A, B]  (written on the last grid step only)
# ---------------------------------------------------------------------------
def _sum_kernel(params_ref, x_ref, ab_ref, acc_ref, *, tail_rows):
    i = pl.program_id(0)
    nsteps = pl.num_programs(0)

    @pl.when(i == 0)
    def _():
        acc_ref[...] = jnp.zeros_like(acc_ref)

    x = x_ref[...].astype(jnp.float32)
    rows, lanes = x.shape
    if tail_rows is not None:
        # Ragged last block: rows past the real slab are out-of-bounds reads
        # (unspecified values) -> zero them before accumulating.
        row = lax.broadcasted_iota(jnp.int32, x.shape, 0)
        keep = (i < nsteps - 1) | (row < tail_rows)
        x = jnp.where(keep, x, 0.0)

    # Per-lane partial sums: pure vreg adds (VPU); the cross-lane XLU reduce
    # and the scalar math happen only once, on the last grid step.
    acc_ref[...] += x.reshape(rows // 8, 8, lanes).sum(axis=0)

    @pl.when(i == nsteps - 1)
    def _():
        sp = params_ref[0]
        n = params_ref[1]
        xbar = jnp.sum(acc_ref[...]) / n
        a, b = _affine_coeffs(sp, xbar)
        ab_ref[0] = a
        ab_ref[1] = b


# ---------------------------------------------------------------------------
# Tiled path, pass 2: elementwise affine rescale out = A*x + B.
#   ab (SMEM, f32[2]) = [A, B]
# ---------------------------------------------------------------------------
def _rescale_kernel(ab_ref, x_ref, o_ref):
    x = x_ref[...].astype(jnp.float32)
    o_ref[...] = (x * ab_ref[0] + ab_ref[1]).astype(o_ref.dtype)


def _pick_fused_lanes(total):
    for cand in (4096, 2048, 1024, 512, 256, 128):
        if total % cand == 0:
            return cand
    return 512


def rescale_prob_map(x, sparsity, *, force_tiled=False, _tile_rows=None):
    """Pallas implementation of RescaleProbMap.forward (exact semantics)."""
    orig_shape = x.shape
    dtype = x.dtype
    total = int(x.size)
    itemsize = jnp.dtype(dtype).itemsize
    sp = jnp.asarray(sparsity, dtype=jnp.float32)
    params = jnp.stack([sp, jnp.float32(total)])
    xf = x.reshape(-1)

    nbytes = total * itemsize

    if nbytes <= _FUSE_BYTES and not force_tiled:
        # -------- fused single-block kernel (one HBM read + one write) --------
        lanes = _pick_fused_lanes(total)
        rows = pl.cdiv(total, lanes)
        padded = rows * lanes
        if padded != total:
            xf = jnp.pad(xf, (0, padded - total))
        x2 = xf.reshape(rows, lanes)
        slab_bytes = padded * itemsize
        vmem_limit = min(int(0.9 * _VMEM_CAP), 4 * slab_bytes + (8 << 20))

        out2 = pl.pallas_call(
            _fused_kernel,
            out_shape=jax.ShapeDtypeStruct((rows, lanes), dtype),
            grid=(1,),
            in_specs=[
                pl.BlockSpec(memory_space=pltpu.MemorySpace.SMEM),
                pl.BlockSpec((rows, lanes), lambda i: (0, 0)),
            ],
            out_specs=pl.BlockSpec((rows, lanes), lambda i: (0, 0)),
            compiler_params=pltpu.CompilerParams(
                dimension_semantics=("arbitrary",),
                vmem_limit_bytes=vmem_limit),
            cost_estimate=pl.CostEstimate(
                flops=3 * padded, transcendentals=0,
                bytes_accessed=2 * slab_bytes),
        )(params, x2)
        # TODO(synk): on v7x the grid=(1,) fused call runs on one of the two
        # TensorCores; a size-2 "parallel" row split with a small cross-core
        # partial-sum exchange would recover the idle core for multi-MiB maps.
    else:
        # -------- tiled two-pass kernels (large prob maps) --------
        lanes = _TILE_LANES
        rows = pl.cdiv(total, lanes)
        rows8 = pl.cdiv(rows, 8) * 8
        padded = rows8 * lanes
        if padded != total:
            # Pad only to a multiple of 8*lanes (<= 16 KiB waste); the ragged
            # last grid block is masked inside the sum kernel instead of
            # padding to a full tile multiple.
            xf = jnp.pad(xf, (0, padded - total))
        x2 = xf.reshape(rows8, lanes)

        tr = _tile_rows if _tile_rows is not None else _TILE_ROWS
        tr = min(tr, rows8)
        ntiles = pl.cdiv(rows8, tr)
        tail = rows8 - (ntiles - 1) * tr
        mask_tail = tail if tail != tr else None
        block_bytes = tr * lanes * itemsize
        vmem_limit = min(int(0.9 * _VMEM_CAP), 4 * block_bytes + (16 << 20))

        # Pass 1: global sum -> (A, B), scalar glue folded into the kernel.
        ab = pl.pallas_call(
            functools.partial(_sum_kernel, tail_rows=mask_tail),
            out_shape=jax.ShapeDtypeStruct((2,), jnp.float32),
            grid=(ntiles,),
            in_specs=[
                pl.BlockSpec(memory_space=pltpu.MemorySpace.SMEM),
                pl.BlockSpec((tr, lanes), lambda i: (i, 0)),
            ],
            out_specs=pl.BlockSpec(memory_space=pltpu.MemorySpace.SMEM),
            scratch_shapes=[pltpu.VMEM((8, lanes), jnp.float32)],
            compiler_params=pltpu.CompilerParams(
                dimension_semantics=("arbitrary",),
                vmem_limit_bytes=vmem_limit),
            cost_estimate=pl.CostEstimate(
                flops=padded, transcendentals=0,
                bytes_accessed=padded * itemsize),
        )(params, x2)
        # TODO(synk): on v7x, split this sum pass across the 2 TensorCores
        # (leading size-2 "parallel" grid axis, per-core accumulators) and
        # combine the partials in the rescale kernel.

        # Pass 2: elementwise affine rescale out = A*x + B.
        out2 = pl.pallas_call(
            _rescale_kernel,
            out_shape=jax.ShapeDtypeStruct((rows8, lanes), dtype),
            grid=(ntiles,),
            in_specs=[
                pl.BlockSpec(memory_space=pltpu.MemorySpace.SMEM),
                pl.BlockSpec((tr, lanes), lambda i: (i, 0)),
            ],
            out_specs=pl.BlockSpec((tr, lanes), lambda i: (i, 0)),
            compiler_params=pltpu.CompilerParams(
                dimension_semantics=("parallel",),
                vmem_limit_bytes=vmem_limit),
            cost_estimate=pl.CostEstimate(
                flops=2 * padded, transcendentals=0,
                bytes_accessed=2 * padded * itemsize),
        )(ab, x2)

    out_flat = out2.reshape(-1)
    if out_flat.shape[0] != total:
        # TODO(synk): ragged totals still cost one small pad and one tail-slice
        # copy outside the kernels; the common power-of-two case skips both.
        out_flat = out_flat[:total]
    return out_flat.reshape(orig_shape)


def _reference(x, sparsity):
    xbar = jnp.mean(x)
    r = sparsity / xbar
    beta = (1.0 - sparsity) / (1.0 - xbar)
    le = (r <= 1.0).astype(x.dtype)
    return le * x * r + (1.0 - le) * (1.0 - (1.0 - x) * beta)


if __name__ == "__main__":
    key = jax.random.PRNGKey(0)
    sparsity = 0.25

    # NCHW prob map, values in (0, 1) — the typical (small, fused) LOUPE case.
    x = jax.random.uniform(key, (2, 4, 16, 16), dtype=jnp.float32,
                           minval=0.05, maxval=0.95)
    ref = _reference(x, jnp.float32(sparsity))
    out = jax.block_until_ready(rescale_prob_map(x, sparsity))
    assert out.shape == x.shape and out.dtype == x.dtype
    assert jnp.allclose(out, ref, atol=1e-5, rtol=1e-5)

    # Tiled two-pass path: multi-tile grid with a ragged (masked) last block,
    # exercised on small data by shrinking the tile rows.
    x_big = jax.random.uniform(jax.random.PRNGKey(2), (1, 1, 100, 257),
                               dtype=jnp.float32, minval=0.05, maxval=0.95)
    out_t = jax.block_until_ready(
        rescale_prob_map(x_big, sparsity, force_tiled=True, _tile_rows=16))
    assert jnp.allclose(out_t, _reference(x_big, jnp.float32(sparsity)),
                        atol=1e-5, rtol=1e-5)

    # Element count not a multiple of 128 — exercises the fused padding path.
    x_odd = jax.random.uniform(jax.random.PRNGKey(1), (3, 5, 7, 11),
                               dtype=jnp.float32, minval=0.05, maxval=0.95)
    out_odd = jax.block_until_ready(rescale_prob_map(x_odd, sparsity))
    assert jnp.allclose(out_odd, _reference(x_odd, jnp.float32(sparsity)),
                        atol=1e-5, rtol=1e-5)

    print("KERNEL_OK")
</pallas_src>

<mosaic_0001>
module attributes {stable_mosaic.version = 11 : i64} {
  func.func @_fused_kernel(%arg0: i32, %arg1: memref<2xf32, #tpu.memory_space<smem>>, %arg2: memref<1x2048xf32, #tpu.memory_space<vmem>>, %arg3: memref<1x2048xf32, #tpu.memory_space<vmem>>) attributes {dimension_semantics = [#tpu.dimension_semantics<arbitrary>], iteration_bounds = array<i64: 1>, scalar_prefetch = 0 : i64, scratch_operands = 0 : i64, tpu.core_type = #tpu.core_type<tc>, window_params = [{transform_indices = @transform_0, window_bounds = array<i64: 2>}, {pipeline_mode = #tpu.pipeline_mode<synchronous>, transform_indices = @transform_1, window_bounds = array<i64: 1, 2048>}, {pipeline_mode = #tpu.pipeline_mode<synchronous>, transform_indices = @transform_2, window_bounds = array<i64: 1, 2048>}]} {
    %c0 = arith.constant 0 : index
    %0 = memref.load %arg1[%c0] : memref<2xf32, #tpu.memory_space<smem>>
    %c1 = arith.constant 1 : index
    %1 = memref.load %arg1[%c1] : memref<2xf32, #tpu.memory_space<smem>>
    %c0_0 = arith.constant 0 : index
    %c0_1 = arith.constant 0 : index
    %2 = vector.load %arg2[%c0_0, %c0_1] : memref<1x2048xf32, #tpu.memory_space<vmem>>, vector<1x2048xf32>
    %3 = vector.shape_cast %2 : vector<1x2048xf32> to vector<1x1x2048xf32>
    %cst = arith.constant dense<0.000000e+00> : vector<1xf32>
    %4 = vector.multi_reduction <add>, %3, %cst [1, 2] : vector<1x1x2048xf32> to vector<1xf32>
    %5 = vector.shape_cast %4 : vector<1xf32> to vector<1x1x1xf32>
    %6 = vector.extract %5[0, 0, 0] : f32 from vector<1x1x1xf32>
    %7 = arith.divf %6, %1 : f32
    %8 = arith.divf %0, %7 : f32
    %cst_2 = arith.constant 1.000000e+00 : f32
    %9 = arith.subf %cst_2, %0 : f32
    %cst_3 = arith.constant 1.000000e+00 : f32
    %10 = arith.subf %cst_3, %7 : f32
    %11 = arith.divf %9, %10 : f32
    %cst_4 = arith.constant 1.000000e+00 : f32
    %12 = arith.cmpf ole, %8, %cst_4 : f32
    %13 = arith.select %12, %8, %11 : f32
    %cst_5 = arith.constant 1.000000e+00 : f32
    %14 = arith.subf %cst_5, %11 : f32
    %cst_6 = arith.constant 0.000000e+00 : f32
    %15 = arith.select %12, %cst_6, %14 : f32
    %16 = vector.broadcast %13 : f32 to vector<1x2048xf32>
    %17 = arith.mulf %2, %16 : vector<1x2048xf32>
    %18 = vector.broadcast %15 : f32 to vector<1x2048xf32>
    %19 = arith.addf %17, %18 : vector<1x2048xf32>
    %c0_7 = arith.constant 0 : index
    %c0_8 = arith.constant 0 : index
    %20 = vector.load %arg3[%c0_7, %c0_8] : memref<1x2048xf32, #tpu.memory_space<vmem>>, vector<1x2048xf32>
    tpu.vector_store %arg3[%c0_7, %c0_8], %19 {strides = array<i32>} : memref<1x2048xf32, #tpu.memory_space<vmem>>, vector<1x2048xf32>,
    return
  }
  func.func @transform_0(%arg0: i32) -> i32 {
    %c0_i32 = arith.constant 0 : i32
    %c0_i32_0 = arith.constant 0 : i32
    return %c0_i32 : i32
  }
  func.func @transform_1(%arg0: i32) -> (i32, i32) {
    %c0_i32 = arith.constant 0 : i32
    %c0_i32_0 = arith.constant 0 : i32
    %c0_i32_1 = arith.constant 0 : i32
    return %c0_i32, %c0_i32_0 : i32, i32
  }
  func.func @transform_2(%arg0: i32) -> (i32, i32) {
    %c0_i32 = arith.constant 0 : i32
    %c0_i32_0 = arith.constant 0 : i32
    %c0_i32_1 = arith.constant 0 : i32
    return %c0_i32, %c0_i32_0 : i32, i32
  }
}

</mosaic_0001>

<llo_original>
// kernel: tpu_custom_call.1
$region0: #{tpu_custom_call.1}
  #allocation0 [shape = 'u32[]', space=smem, size = 0x4, offset = 0x4, fixed_abs, tag = 'smem constant byte address 0x4 - core index']
  #allocation1 [shape = 'u32[144,128]{1,0:T(1,128)}', space=vmem, size = 0x12000, scoped, tag = 'internal scratch']
  %s0 = inlined_call_operand.hbm [shape: f32[2], index: 0, kind: input, shape index: {}]
  %s1 = inlined_call_operand.hbm [shape: f32[1,2048], index: 1, kind: input, shape index: {}]
  %s2 = inlined_call_operand.hbm [shape: f32[1,2048], index: 2, kind: output, shape index: {}]
  %s3 = sld [smem:[#allocation0]]
  $region26: #{tpu_custom_call.1} parent=0
    _
  %s5 = ssub.s32 1, %s3
  %s6 = scalar_select 0, %s5, %s3
  $region1: #{tpu_custom_call.1} parent=0
    #allocation2 [shape = 'u8[512]{0}', space=smem, size = 0x200, scoped, tag = 'input window, operand 0, single buffered']
    #allocation3 [shape = 's32[1]{0}', space=sflag, size = 0x4, scoped, tag = 'scoped memory for tpu_custom_call.1']
    #allocation4 [shape = 's32[1]{0}', space=sflag, size = 0x4, scoped, tag = 'scoped memory for tpu_custom_call.1']
    #allocation5 [shape = 's32[1]{0}', space=sflag, size = 0x4, scoped, tag = 'scoped memory for tpu_custom_call.1']
    #allocation6 [shape = 'u8[8192]{0}', space=vmem, size = 0x2000, scoped, tag = 'input window, operand 1, single buffered']
    #allocation7 [shape = 'u8[8192]{0}', space=vmem, size = 0x2000, scoped, tag = 'output window, operand 0, single buffered']
    %7 = vsyncpa [#allocation5], 0
    %8 = vsyncpa [#allocation3], 0
    %9 = vsyncpa [#allocation4], 0
    // Predicated region
    $region2: #{tpu_custom_call.1} parent=1 // pred_check
      _
    $region3: #{tpu_custom_call.1} parent=1 // pred_check_branch
      %11 = sbr.rel (0) target = $region5
    $region4: #{tpu_custom_call.1} parent=1 // pred_region
      %s13 = ssub.s32 16, 16
      %14 = vsyncadd [#allocation5], %s13
      %17 = dma.hbm_to_smem %s0, 16, [#allocation2], [#allocation5]
    $region5: #{tpu_custom_call.1} parent=1 // pred_fallthru
      _
    // Predicated region
    $region6: #{tpu_custom_call.1} parent=1 // pred_check
      _
    $region7: #{tpu_custom_call.1} parent=1 // pred_check_branch
      %19 = sbr.rel (0) target = $region9
    $region8: #{tpu_custom_call.1} parent=1 // pred_region
      %s21 = ssub.s32 256, 256
      %22 = vsyncadd [#allocation3], %s21
      %s24 = sshll.u32 [#allocation6], 4
      %s25 = int_to_ptr.vmem [resolvable:$true] %s24
      %27 = dma.hbm_to_vmem [thread:$0]  %s1, 256, %s25, [#allocation3]
    $region9: #{tpu_custom_call.1} parent=1 // pred_fallthru
      _
    // Predicated region
    $region10: #{tpu_custom_call.1} parent=1 // pred_check
      _
    $region11: #{tpu_custom_call.1} parent=1 // pred_check_branch
      %29 = sbr.rel (0) target = $region13
    $region12: #{tpu_custom_call.1} parent=1 // pred_region
      %30 = dma.done [#allocation5], 16
    $region13: #{tpu_custom_call.1} parent=1 // pred_fallthru
      _
    // Predicated region
    $region14: #{tpu_custom_call.1} parent=1 // pred_check
      _
    $region15: #{tpu_custom_call.1} parent=1 // pred_check_branch
      %32 = sbr.rel (0) target = $region17
    $region16: #{tpu_custom_call.1} parent=1 // pred_region
      %33 = dma.done [#allocation3], 256
    $region17: #{tpu_custom_call.1} parent=1 // pred_fallthru
      _
    %34 = sfence
    %s35 = sld [smem:[#allocation2]]
    %s36 = sld [smem:[#allocation2 + $0x1]]
    %v37 = vld [vmem:[#allocation6] sm:$0xff]
    %v38 = vld [vmem:[#allocation6 + $0x8] sm:$0xff]
    %v41 = vlaneseq
    %v42 = vshrl.u32 %v41, 7
    %v43 = vsub.s32 0, %v42
    %v44 = vrot.slane %v37, %v43
    %v45 = vlaneseq
    %v46 = vshrl.u32 %v45, 7
    %v47 = vsub.s32 1, %v46
    %v48 = vrot.slane %v37, %v47
    %v49 = vlaneseq
    %v50 = vshrl.u32 %v49, 7
    %v51 = vsub.s32 2, %v50
    %v52 = vrot.slane %v37, %v51
    %v53 = vlaneseq
    %v54 = vshrl.u32 %v53, 7
    %v55 = vsub.s32 3, %v54
    %v56 = vrot.slane %v37, %v55
    %v57 = vlaneseq
    %v58 = vshrl.u32 %v57, 7
    %v59 = vsub.s32 4, %v58
    %v60 = vrot.slane %v37, %v59
    %v61 = vlaneseq
    %v62 = vshrl.u32 %v61, 7
    %v63 = vsub.s32 5, %v62
    %v64 = vrot.slane %v37, %v63
    %v65 = vlaneseq
    %v66 = vshrl.u32 %v65, 7
    %v67 = vsub.s32 6, %v66
    %v68 = vrot.slane %v37, %v67
    %v69 = vlaneseq
    %v70 = vshrl.u32 %v69, 7
    %v71 = vsub.s32 7, %v70
    %v72 = vrot.slane %v37, %v71
    %v73 = vlaneseq
    %v74 = vshrl.u32 %v73, 7
    %v75 = vsub.s32 0, %v74
    %v76 = vrot.slane %v38, %v75
    %v77 = vlaneseq
    %v78 = vshrl.u32 %v77, 7
    %v79 = vsub.s32 1, %v78
    %v80 = vrot.slane %v38, %v79
    %v81 = vlaneseq
    %v82 = vshrl.u32 %v81, 7
    %v83 = vsub.s32 2, %v82
    %v84 = vrot.slane %v38, %v83
    %v85 = vlaneseq
    %v86 = vshrl.u32 %v85, 7
    %v87 = vsub.s32 3, %v86
    %v88 = vrot.slane %v38, %v87
    %v89 = vlaneseq
    %v90 = vshrl.u32 %v89, 7
    %v91 = vsub.s32 4, %v90
    %v92 = vrot.slane %v38, %v91
    %v93 = vlaneseq
    %v94 = vshrl.u32 %v93, 7
    %v95 = vsub.s32 5, %v94
    %v96 = vrot.slane %v38, %v95
    %v97 = vlaneseq
    %v98 = vshrl.u32 %v97, 7
    %v99 = vsub.s32 6, %v98
    %v100 = vrot.slane %v38, %v99
    %v101 = vlaneseq
    %v102 = vshrl.u32 %v101, 7
    %v103 = vsub.s32 7, %v102
    %v104 = vrot.slane %v38, %v103
    %vm121 = vcmask 1040384
    %v122 = vsel %vm121, %v44, 0.0
    %v123 = vsel %vm121, %v48, 0.0
    %v124 = vadd.f32 %v122, %v123
    %v125 = vsel %vm121, %v52, 0.0
    %v126 = vadd.f32 %v124, %v125
    %v127 = vsel %vm121, %v56, 0.0
    %v128 = vadd.f32 %v126, %v127
    %v129 = vsel %vm121, %v60, 0.0
    %v130 = vadd.f32 %v128, %v129
    %v131 = vsel %vm121, %v64, 0.0
    %v132 = vadd.f32 %v130, %v131
    %v133 = vsel %vm121, %v68, 0.0
    %v134 = vadd.f32 %v132, %v133
    %v135 = vsel %vm121, %v72, 0.0
    %v136 = vadd.f32 %v134, %v135
    %v137 = vsel %vm121, %v76, 0.0
    %v138 = vadd.f32 %v136, %v137
    %v139 = vsel %vm121, %v80, 0.0
    %v140 = vadd.f32 %v138, %v139
    %v141 = vsel %vm121, %v84, 0.0
    %v142 = vadd.f32 %v140, %v141
    %v143 = vsel %vm121, %v88, 0.0
    %v144 = vadd.f32 %v142, %v143
    %v145 = vsel %vm121, %v92, 0.0
    %v146 = vadd.f32 %v144, %v145
    %v147 = vsel %vm121, %v96, 0.0
    %v148 = vadd.f32 %v146, %v147
    %v149 = vsel %vm121, %v100, 0.0
    %v150 = vadd.f32 %v148, %v149
    %v151 = vsel %vm121, %v104, 0.0
    %v152 = vadd.f32 %v150, %v151
    %153 = vadd.xlane.f32.xlu0 %v152
    %v154 = vpop.xlane.xlu0 %153
    %v155 = vrot.slane %v154, 4
    %v156 = vadd.f32 %v154, %v155
    %v157 = vrot.slane %v156, 2
    %v158 = vadd.f32 %v156, %v157
    %v159 = vrot.slane %v158, 1
    %v160 = vadd.f32 %v158, %v159
    %s161 = vtos %v160
    %v162 = vstv %s36
    %v163 = vrcp.pop %v162
    %s164 = vtos %v163
    %s165 = smul.f32 %s161, %s164
    %v166 = vstv %s165
    %v167 = vrcp.pop %v166
    %s168 = vtos %v167
    %s169 = smul.f32 %s35, %s168
    %s170 = ssub.f32 1.0, %s35
    %s171 = ssub.f32 1.0, %s165
    %v172 = vstv %s171
    %v173 = vrcp.pop %v172
    %s174 = vtos %v173
    %s175 = smul.f32 %s170, %s174
    %p176 = scmp.le.f32.partialorder %s169, 1.0
    %s177 = scalar_select %p176, %s169, %s175
    %s178 = ssub.f32 1.0, %s175
    %s179 = scalar_select %p176, 0.0, %s178
    %v180 = vstv %s177
    %v181 = vmul.f32 %v37, %v180
    %v182 = vmul.f32 %v38, %v180
    %v183 = vstv %s179
    %v184 = vadd.f32 %v181, %v183
    %v185 = vadd.f32 %v182, %v183
    %186 = vst [vmem:[#allocation7] sm:$0xff] %v184
    %187 = vst [vmem:[#allocation7 + $0x8] sm:$0xff] %v185
    // Predicated region
    $region18: #{tpu_custom_call.1} parent=1 // pred_check
      _
    $region19: #{tpu_custom_call.1} parent=1 // pred_check_branch
      %189 = sbr.rel (0) target = $region21
    $region20: #{tpu_custom_call.1} parent=1 // pred_region
      %s191 = ssub.s32 256, 256
      %192 = vsyncadd [#allocation4], %s191
      %s194 = sshll.u32 [#allocation7], 4
      %s195 = int_to_ptr.vmem [resolvable:$true] %s194
      %197 = dma.vmem_to_hbm [thread:$0]  %s195, 256, %s2, [#allocation4]
    $region21: #{tpu_custom_call.1} parent=1 // pred_fallthru
      _
    // Predicated region
    $region22: #{tpu_custom_call.1} parent=1 // pred_check
      _
    $region23: #{tpu_custom_call.1} parent=1 // pred_check_branch
      %199 = sbr.rel (0) target = $region25
    $region24: #{tpu_custom_call.1} parent=1 // pred_region
      %200 = dma.done [#allocation4], 256
    $region25: #{tpu_custom_call.1} parent=1 // pred_fallthru
      _
    %201 = vsyncpa [#allocation3], 1
    %202 = vsyncpa [#allocation4], 1
    %203 = vsyncpa [#allocation5], 1

</llo_original>
